<compile_context>
chip_gen: v6e
topology: v6e:2x2x1
jax: 0.10.0
libtpu: 0.0.40
codegen_flags: <defaults>
</compile_context>

<pallas_src>
import functools
import math

import jax
import jax.numpy as jnp
import jax.scipy.special  # for the reference erf
from jax.experimental import pallas as pl
from jax.experimental.pallas import tpu as pltpu


_INV_SQRT2 = 1.0 / math.sqrt(2.0)

# Conservative double-buffered working-set budget: leaves headroom inside the
# 64 MiB physical VMEM of a v7x TensorCore (v5e/v6e have 128 MiB physical).
_VMEM_BUDGET_BYTES = 40 * 1024 * 1024


def _round_up(v, m):
    return ((v + m - 1) // m) * m


def _erf(x, approx_recip=False):
    # Abramowitz & Stegun 7.1.26 rational approximation of erf.
    # Uses only VPU/EUP-native ops (abs/mul/add/exp/recip/select).
    a1 = 0.254829592
    a2 = -0.284496736
    a3 = 1.421413741
    a4 = -1.453152027
    a5 = 1.061405429
    p = 0.3275911
    ax = jnp.abs(x)
    den = 1.0 + p * ax
    if approx_recip:
        # EUP slot (nearly free); precision fine at bf16 resolution.
        t = pl.reciprocal(den, approx=True)
    else:
        t = 1.0 / den
    poly = ((((a5 * t + a4) * t + a3) * t + a2) * t + a1) * t
    y = 1.0 - poly * jnp.exp(-ax * ax)
    return jnp.where(x >= 0, y, -y)


def _gelu(x, approx_recip=False):
    # Exact (erf-based) GELU matching the PyTorch reference:
    #   x * 0.5 * (1 + erf(x / sqrt(2)))
    return 0.5 * x * (1.0 + _erf(x * _INV_SQRT2, approx_recip))


def _head_kernel(x_ref, w1_ref, b1_ref, w2_ref, b2_ref, out_ref, *, bf16_act):
    x = x_ref[...]                                                    # (TN, H)

    # dense: (TN, H) @ (H, Dp) + b1, f32 MXU accumulate.
    h = jnp.dot(x, w1_ref[...], preferred_element_type=jnp.float32)  # (TN, Dp)
    h = h + b1_ref[...].astype(jnp.float32)

    if bf16_act:
        # bf16 inputs on v6e/v7x: native bf16 VPU/EUP (2x packed elementwise
        # throughput) + EUP approx reciprocal keeps the erf GELU off the
        # critical VALU slot.
        h = _gelu(h.astype(jnp.bfloat16), approx_recip=True)
    else:
        h = _gelu(h, approx_recip=False)

    # proj: (TN, Dp) @ (Dp, Lp) + b2, f32 MXU accumulate.
    h = h.astype(x.dtype)
    out = jnp.dot(h, w2_ref[...], preferred_element_type=jnp.float32)  # (TN, Lp)
    out = out + b2_ref[...].astype(jnp.float32)

    out_ref[...] = out.astype(out_ref.dtype)


def _vmem_bytes(tn, H, Dp, Lp, in_bytes, out_bytes):
    # Double-buffered streaming tiles + (conservatively double-buffered)
    # grid-invariant weight/bias blocks.
    x_buf = 2 * tn * H * in_bytes
    o_buf = 2 * tn * Lp * out_bytes
    w_buf = 2 * ((H * Dp + Dp) + (Dp * Lp + Lp)) * in_bytes
    return x_buf + o_buf + w_buf


def _choose_token_tile(requested, N, H, Dp, Lp, in_bytes, out_bytes):
    tn = max(8, min(_round_up(requested, 8), _round_up(N, 8)))
    # Shrink while the working set exceeds the VMEM budget, or (v7x megacore)
    # while the grid would be too short to give both TensorCores several
    # pipelined steps (never shrink below 256 for that reason alone).
    while tn > 128 and (
        _vmem_bytes(tn, H, Dp, Lp, in_bytes, out_bytes) > _VMEM_BUDGET_BYTES
        or (tn > 256 and pl.cdiv(N, tn) < 8)):
        tn //= 2
    return tn


def prepare_mask_head_params(w_dense, b_dense, w_proj, b_proj, param_dtype):
    """One-time weight padding/transpose, hoisted out of the per-call path.

    dense: Linear(H -> D) weight [D, H], bias [D]
    proj : Linear(D -> L) weight [L, D], bias [L]
    D and L are zero-padded to lane-dense multiples of 128; padding is exact
    (gelu(0) = 0 and the padded rows of the proj weight are zero).
    """
    D, H = w_dense.shape
    L = w_proj.shape[0]
    Dp = _round_up(D, 128)
    Lp = _round_up(L, 128)
    w1 = jnp.zeros((H, Dp), param_dtype).at[:, :D].set(w_dense.T.astype(param_dtype))
    b1 = jnp.zeros((1, Dp), param_dtype).at[0, :D].set(b_dense.astype(param_dtype))
    w2 = jnp.zeros((Dp, Lp), param_dtype).at[:D, :L].set(w_proj.T.astype(param_dtype))
    b2 = jnp.zeros((1, Lp), param_dtype).at[0, :L].set(b_proj.astype(param_dtype))
    return w1, b1, w2, b2


@functools.partial(jax.jit, static_argnames=("num_labels", "token_tile"))
def bert_mask_n_prediction_head(sequence_output, w1, b1, w2, b2, *,
                                num_labels, token_tile=512):
    B, S, H = sequence_output.shape
    Dp = w1.shape[1]
    Lp = w2.shape[1]
    N = B * S
    dtype = sequence_output.dtype
    in_bytes = jnp.dtype(dtype).itemsize
    out_bytes = in_bytes                      # output dtype matches input dtype

    TN = _choose_token_tile(token_tile, N, H, Dp, Lp, in_bytes, out_bytes)
    grid = (pl.cdiv(N, TN),)                  # ragged boundary block: reads padded,
                                              # OOB writes masked; no x pad copy.

    x = sequence_output.reshape(N, H)
    bf16_act = jnp.dtype(dtype) == jnp.bfloat16   # keep f32 elementwise otherwise (v5e-safe)

    vmem_limit = int(min(
        max(int(1.5 * _vmem_bytes(TN, H, Dp, Lp, in_bytes, out_bytes)),
            32 * 1024 * 1024),
        64 * 1024 * 1024))                    # <= v7x physical; below default cap elsewhere

    out = pl.pallas_call(
        functools.partial(_head_kernel, bf16_act=bf16_act),
        out_shape=jax.ShapeDtypeStruct((N, Lp), dtype),
        grid=grid,
        in_specs=[
            pl.BlockSpec((TN, H), lambda i: (i, 0)),    # token tile of x
            pl.BlockSpec((H, Dp), lambda i: (0, 0)),    # dense weight (grid-invariant)
            pl.BlockSpec((1, Dp), lambda i: (0, 0)),    # dense bias
            pl.BlockSpec((Dp, Lp), lambda i: (0, 0)),   # proj weight (grid-invariant)
            pl.BlockSpec((1, Lp), lambda i: (0, 0)),    # proj bias
        ],
        out_specs=pl.BlockSpec((TN, Lp), lambda i: (i, 0)),
        compiler_params=pltpu.CompilerParams(
            dimension_semantics=("parallel",),
            vmem_limit_bytes=vmem_limit),
    )(x, w1, b1, w2, b2)

    # Drop lane padding, restore [B, S, L].
    return out[:, :num_labels].reshape(B, S, num_labels)


def _reference(sequence_output, w_dense, b_dense, w_proj, b_proj):
    h = sequence_output @ w_dense.T + b_dense
    h = 0.5 * h * (1.0 + jax.scipy.special.erf(h * _INV_SQRT2))   # exact GELU
    return h @ w_proj.T + b_proj


if __name__ == "__main__":
    # Small BERT-ish config.
    hidden_size = 128
    dense_n_masks_size = 50      # config.dense_n_masks_size default
    NUM_LABELS_N_MASKS = 11      # small label count (constant not in the snippet)
    B, S = 2, 8

    key = jax.random.PRNGKey(0)
    k_x, k_w1, k_b1, k_w2, k_b2 = jax.random.split(key, 5)

    sequence_output = 0.5 * jax.random.normal(k_x, (B, S, hidden_size), jnp.float32)
    w_dense = 0.05 * jax.random.normal(k_w1, (dense_n_masks_size, hidden_size), jnp.float32)
    b_dense = 0.02 * jax.random.normal(k_b1, (dense_n_masks_size,), jnp.float32)
    w_proj = 0.05 * jax.random.normal(k_w2, (NUM_LABELS_N_MASKS, dense_n_masks_size), jnp.float32)
    b_proj = 0.02 * jax.random.normal(k_b2, (NUM_LABELS_N_MASKS,), jnp.float32)

    # One-time (init-time) weight preparation — hoisted out of the forward path.
    w1, b1, w2, b2 = prepare_mask_head_params(
        w_dense, b_dense, w_proj, b_proj, sequence_output.dtype)

    out = bert_mask_n_prediction_head(
        sequence_output, w1, b1, w2, b2, num_labels=NUM_LABELS_N_MASKS)
    out = jax.block_until_ready(out)

    ref = _reference(sequence_output, w_dense, b_dense, w_proj, b_proj)
    assert out.shape == (B, S, NUM_LABELS_N_MASKS)
    assert jnp.allclose(out, ref, atol=2e-5, rtol=2e-5), "mismatch vs reference"

    print("KERNEL_OK")
</pallas_src>

<mosaic_0001>
module attributes {stable_mosaic.version = 11 : i64} {
  func.func @_head_kernel(%arg0: i32, %arg1: memref<16x128xf32, #tpu.memory_space<vmem>>, %arg2: memref<128x128xf32, #tpu.memory_space<vmem>>, %arg3: memref<1x128xf32, #tpu.memory_space<vmem>>, %arg4: memref<128x128xf32, #tpu.memory_space<vmem>>, %arg5: memref<1x128xf32, #tpu.memory_space<vmem>>, %arg6: memref<16x128xf32, #tpu.memory_space<vmem>>) attributes {dimension_semantics = [#tpu.dimension_semantics<parallel>], iteration_bounds = array<i64: 1>, scalar_prefetch = 0 : i64, scratch_operands = 0 : i64, tpu.core_type = #tpu.core_type<tc>, window_params = [{transform_indices = @transform_0, window_bounds = array<i64: 16, 128>}, {pipeline_mode = #tpu.pipeline_mode<synchronous>, transform_indices = @transform_1, window_bounds = array<i64: 128, 128>}, {pipeline_mode = #tpu.pipeline_mode<synchronous>, transform_indices = @transform_2, window_bounds = array<i64: 1, 128>}, {pipeline_mode = #tpu.pipeline_mode<synchronous>, transform_indices = @transform_3, window_bounds = array<i64: 128, 128>}, {pipeline_mode = #tpu.pipeline_mode<synchronous>, transform_indices = @transform_4, window_bounds = array<i64: 1, 128>}, {transform_indices = @transform_5, window_bounds = array<i64: 16, 128>}]} {
    %c0 = arith.constant 0 : index
    %c0_0 = arith.constant 0 : index
    %0 = vector.load %arg1[%c0, %c0_0] : memref<16x128xf32, #tpu.memory_space<vmem>>, vector<16x128xf32>
    %c0_1 = arith.constant 0 : index
    %c0_2 = arith.constant 0 : index
    %1 = vector.load %arg2[%c0_1, %c0_2] : memref<128x128xf32, #tpu.memory_space<vmem>>, vector<128x128xf32>
    %cst = arith.constant dense<0.000000e+00> : vector<16x128xf32>
    %2 = tpu.matmul %0, %1, %cst {dimension_numbers = #tpu.dot_dimension_numbers<[1], [0], [0], [1], [0, 0, 1, 1], [], []>} : vector<16x128xf32>, vector<128x128xf32>, vector<16x128xf32> -> vector<16x128xf32>
    %c0_3 = arith.constant 0 : index
    %c0_4 = arith.constant 0 : index
    %3 = vector.load %arg3[%c0_3, %c0_4] : memref<1x128xf32, #tpu.memory_space<vmem>>, vector<1x128xf32>
    %4 = vector.broadcast %3 : vector<1x128xf32> to vector<16x128xf32>
    %5 = arith.addf %2, %4 : vector<16x128xf32>
    %cst_5 = arith.constant 5.000000e-01 : f32
    %6 = vector.broadcast %cst_5 : f32 to vector<16x128xf32>
    %7 = arith.mulf %6, %5 : vector<16x128xf32>
    %cst_6 = arith.constant 0.707106769 : f32
    %8 = vector.broadcast %cst_6 : f32 to vector<16x128xf32>
    %9 = arith.mulf %5, %8 : vector<16x128xf32>
    %10 = math.absf %9 : vector<16x128xf32>
    %cst_7 = arith.constant 0.327591091 : f32
    %11 = vector.broadcast %cst_7 : f32 to vector<16x128xf32>
    %12 = arith.mulf %11, %10 : vector<16x128xf32>
    %cst_8 = arith.constant 1.000000e+00 : f32
    %13 = vector.broadcast %cst_8 : f32 to vector<16x128xf32>
    %14 = arith.addf %13, %12 : vector<16x128xf32>
    %cst_9 = arith.constant 1.000000e+00 : f32
    %15 = vector.broadcast %cst_9 : f32 to vector<16x128xf32>
    %16 = arith.divf %15, %14 : vector<16x128xf32>
    %cst_10 = arith.constant 1.06140542 : f32
    %17 = vector.broadcast %cst_10 : f32 to vector<16x128xf32>
    %18 = arith.mulf %17, %16 : vector<16x128xf32>
    %cst_11 = arith.constant -1.45315206 : f32
    %19 = vector.broadcast %cst_11 : f32 to vector<16x128xf32>
    %20 = arith.addf %18, %19 : vector<16x128xf32>
    %21 = arith.mulf %20, %16 : vector<16x128xf32>
    %cst_12 = arith.constant 1.42141378 : f32
    %22 = vector.broadcast %cst_12 : f32 to vector<16x128xf32>
    %23 = arith.addf %21, %22 : vector<16x128xf32>
    %24 = arith.mulf %23, %16 : vector<16x128xf32>
    %cst_13 = arith.constant -0.284496725 : f32
    %25 = vector.broadcast %cst_13 : f32 to vector<16x128xf32>
    %26 = arith.addf %24, %25 : vector<16x128xf32>
    %27 = arith.mulf %26, %16 : vector<16x128xf32>
    %cst_14 = arith.constant 0.254829586 : f32
    %28 = vector.broadcast %cst_14 : f32 to vector<16x128xf32>
    %29 = arith.addf %27, %28 : vector<16x128xf32>
    %30 = arith.mulf %29, %16 : vector<16x128xf32>
    %cst_15 = arith.constant 0.000000e+00 : f32
    %31 = vector.broadcast %cst_15 : f32 to vector<16x128xf32>
    %32 = arith.subf %31, %10 : vector<16x128xf32>
    %33 = arith.mulf %32, %10 : vector<16x128xf32>
    %34 = math.exp %33 : vector<16x128xf32>
    %35 = arith.mulf %30, %34 : vector<16x128xf32>
    %cst_16 = arith.constant 1.000000e+00 : f32
    %36 = vector.broadcast %cst_16 : f32 to vector<16x128xf32>
    %37 = arith.subf %36, %35 : vector<16x128xf32>
    %cst_17 = arith.constant 0.000000e+00 : f32
    %38 = vector.broadcast %cst_17 : f32 to vector<16x128xf32>
    %39 = arith.cmpf oge, %9, %38 : vector<16x128xf32>
    %cst_18 = arith.constant 0.000000e+00 : f32
    %40 = vector.broadcast %cst_18 : f32 to vector<16x128xf32>
    %41 = arith.subf %40, %37 : vector<16x128xf32>
    %42 = arith.select %39, %37, %41 : vector<16x128xi1>, vector<16x128xf32>
    %cst_19 = arith.constant 1.000000e+00 : f32
    %43 = vector.broadcast %cst_19 : f32 to vector<16x128xf32>
    %44 = arith.addf %43, %42 : vector<16x128xf32>
    %45 = arith.mulf %7, %44 : vector<16x128xf32>
    %c0_20 = arith.constant 0 : index
    %c0_21 = arith.constant 0 : index
    %46 = vector.load %arg4[%c0_20, %c0_21] : memref<128x128xf32, #tpu.memory_space<vmem>>, vector<128x128xf32>
    %cst_22 = arith.constant dense<0.000000e+00> : vector<16x128xf32>
    %47 = tpu.matmul %45, %46, %cst_22 {dimension_numbers = #tpu.dot_dimension_numbers<[1], [0], [0], [1], [0, 0, 1, 1], [], []>} : vector<16x128xf32>, vector<128x128xf32>, vector<16x128xf32> -> vector<16x128xf32>
    %c0_23 = arith.constant 0 : index
    %c0_24 = arith.constant 0 : index
    %48 = vector.load %arg5[%c0_23, %c0_24] : memref<1x128xf32, #tpu.memory_space<vmem>>, vector<1x128xf32>
    %49 = vector.broadcast %48 : vector<1x128xf32> to vector<16x128xf32>
    %50 = arith.addf %47, %49 : vector<16x128xf32>
    %c0_25 = arith.constant 0 : index
    %c0_26 = arith.constant 0 : index
    %51 = vector.load %arg6[%c0_25, %c0_26] : memref<16x128xf32, #tpu.memory_space<vmem>>, vector<16x128xf32>
    tpu.vector_store %arg6[%c0_25, %c0_26], %50 {strides = array<i32>} : memref<16x128xf32, #tpu.memory_space<vmem>>, vector<16x128xf32>,
    return
  }
  func.func @transform_0(%arg0: i32) -> (i32, i32) {
    %c0_i32 = arith.constant 0 : i32
    %c0_i32_0 = arith.constant 0 : i32
    return %arg0, %c0_i32 : i32, i32
  }
  func.func @transform_1(%arg0: i32) -> (i32, i32) {
    %c0_i32 = arith.constant 0 : i32
    %c0_i32_0 = arith.constant 0 : i32
    %c0_i32_1 = arith.constant 0 : i32
    return %c0_i32, %c0_i32_0 : i32, i32
  }
  func.func @transform_2(%arg0: i32) -> (i32, i32) {
    %c0_i32 = arith.constant 0 : i32
    %c0_i32_0 = arith.constant 0 : i32
    %c0_i32_1 = arith.constant 0 : i32
    return %c0_i32, %c0_i32_0 : i32, i32
  }
  func.func @transform_3(%arg0: i32) -> (i32, i32) {
    %c0_i32 = arith.constant 0 : i32
    %c0_i32_0 = arith.constant 0 : i32
    %c0_i32_1 = arith.constant 0 : i32
    return %c0_i32, %c0_i32_0 : i32, i32
  }
  func.func @transform_4(%arg0: i32) -> (i32, i32) {
    %c0_i32 = arith.constant 0 : i32
    %c0_i32_0 = arith.constant 0 : i32
    %c0_i32_1 = arith.constant 0 : i32
    return %c0_i32, %c0_i32_0 : i32, i32
  }
  func.func @transform_5(%arg0: i32) -> (i32, i32) {
    %c0_i32 = arith.constant 0 : i32
    %c0_i32_0 = arith.constant 0 : i32
    return %arg0, %c0_i32 : i32, i32
  }
}

</mosaic_0001>

<llo_original>
// kernel: bert_mask_n_prediction_head.1
$region0: #{bert_mask_n_prediction_head.1}
  #allocation0 [shape = 'u32[]', space=smem, size = 0x4, offset = 0x4, fixed_abs, tag = 'smem constant byte address 0x4 - core index']
  #allocation1 [shape = 'u32[144,128]{1,0:T(1,128)}', space=vmem, size = 0x12000, scoped, tag = 'internal scratch']
  %s0 = inlined_call_operand.hbm [shape: f32[16,128], index: 0, kind: input, shape index: {}]
  %s1 = inlined_call_operand.hbm [shape: f32[128,128], index: 1, kind: input, shape index: {}]
  %s2 = inlined_call_operand.vmem [shape: f32[1,128], index: 2, kind: input, shape index: {}]
  %s3 = inlined_call_operand.hbm [shape: f32[128,128], index: 3, kind: input, shape index: {}]
  %s4 = inlined_call_operand.vmem [shape: f32[1,128], index: 4, kind: input, shape index: {}]
  %s5 = inlined_call_operand.vmem [shape: f32[16,128], index: 5, kind: output, shape index: {}]
  %s6 = sld [smem:[#allocation0]]
  $region42: #{bert_mask_n_prediction_head.1} parent=0
    _
  %s8 = ssub.s32 1, %s6
  %s9 = scalar_select 0, %s8, %s6
  $region1: #{bert_mask_n_prediction_head.1} parent=0
    #allocation2 [shape = 'u8[8192]{0}', space=vmem, size = 0x2000, scoped, tag = 'input window, operand 0, single buffered']
    #allocation3 [shape = 's32[1]{0}', space=sflag, size = 0x4, scoped, tag = 'scoped memory for bert_mask_n_prediction_head.1']
    #allocation4 [shape = 'u8[65536]{0}', space=vmem, size = 0x10000, scoped, tag = 'input window, operand 1, single buffered']
    #allocation5 [shape = 's32[1]{0}', space=sflag, size = 0x4, scoped, tag = 'scoped memory for bert_mask_n_prediction_head.1']
    #allocation6 [shape = 'u8[65536]{0}', space=vmem, size = 0x10000, scoped, tag = 'input window, operand 3, single buffered']
    %10 = vsyncpa [#allocation3], 0
    %11 = vsyncpa [#allocation5], 0
    // Predicated region
    $region2: #{bert_mask_n_prediction_head.1} parent=1 // pred_check
      _
    $region3: #{bert_mask_n_prediction_head.1} parent=1 // pred_check_branch
      %13 = sbr.rel (0) target = $region5
    $region4: #{bert_mask_n_prediction_head.1} parent=1 // pred_region
      %s15 = ssub.s32 256, 256
      %16 = vsyncadd [#allocation3], %s15
      %s17 = sshll.u32 [#allocation2], 4
      %s18 = int_to_ptr.vmem [resolvable:$true] %s17
      %23 = dma.hbm_to_vmem [thread:$0]  %s0, 256, %s18, [#allocation3], 128, 128, 8
    $region5: #{bert_mask_n_prediction_head.1} parent=1 // pred_fallthru
      _
    // Predicated region
    $region6: #{bert_mask_n_prediction_head.1} parent=1 // pred_check
      _
    $region7: #{bert_mask_n_prediction_head.1} parent=1 // pred_check_branch
      %25 = sbr.rel (0) target = $region9
    $region8: #{bert_mask_n_prediction_head.1} parent=1 // pred_region
      %s27 = ssub.s32 2048, 2048
      %28 = vsyncadd [#allocation5], %s27
      %s29 = sshll.u32 [#allocation4], 4
      %s30 = int_to_ptr.vmem [resolvable:$true] %s29
      %35 = dma.hbm_to_vmem [thread:$0]  %s1, 2048, %s30, [#allocation5], 128, 128, 8
    $region9: #{bert_mask_n_prediction_head.1} parent=1 // pred_fallthru
      _
    // Predicated region
    $region10: #{bert_mask_n_prediction_head.1} parent=1 // pred_check
      _
    $region11: #{bert_mask_n_prediction_head.1} parent=1 // pred_check_branch
      %37 = sbr.rel (0) target = $region13
    $region12: #{bert_mask_n_prediction_head.1} parent=1 // pred_region
      _
    $region13: #{bert_mask_n_prediction_head.1} parent=1 // pred_fallthru
      _
    // Predicated region
    $region14: #{bert_mask_n_prediction_head.1} parent=1 // pred_check
      _
    $region15: #{bert_mask_n_prediction_head.1} parent=1 // pred_check_branch
      %39 = sbr.rel (0) target = $region17
    $region16: #{bert_mask_n_prediction_head.1} parent=1 // pred_region
      %s41 = ssub.s32 2048, 2048
      %42 = vsyncadd [#allocation5], %s41
      %s43 = sshll.u32 [#allocation6], 4
      %s44 = int_to_ptr.vmem [resolvable:$true] %s43
      %49 = dma.hbm_to_vmem [thread:$0]  %s3, 2048, %s44, [#allocation5], 128, 128, 8
    $region17: #{bert_mask_n_prediction_head.1} parent=1 // pred_fallthru
      _
    // Predicated region
    $region18: #{bert_mask_n_prediction_head.1} parent=1 // pred_check
      _
    $region19: #{bert_mask_n_prediction_head.1} parent=1 // pred_check_branch
      %51 = sbr.rel (0) target = $region21
    $region20: #{bert_mask_n_prediction_head.1} parent=1 // pred_region
      _
    $region21: #{bert_mask_n_prediction_head.1} parent=1 // pred_fallthru
      _
    // Predicated region
    $region22: #{bert_mask_n_prediction_head.1} parent=1 // pred_check
      _
    $region23: #{bert_mask_n_prediction_head.1} parent=1 // pred_check_branch
      %53 = sbr.rel (0) target = $region25
    $region24: #{bert_mask_n_prediction_head.1} parent=1 // pred_region
      %54 = dma.done [#allocation3], 256
    $region25: #{bert_mask_n_prediction_head.1} parent=1 // pred_fallthru
      _
    // Predicated region
    $region26: #{bert_mask_n_prediction_head.1} parent=1 // pred_check
      _
    $region27: #{bert_mask_n_prediction_head.1} parent=1 // pred_check_branch
      %56 = sbr.rel (0) target = $region29
    $region28: #{bert_mask_n_prediction_head.1} parent=1 // pred_region
      %57 = dma.done [#allocation5], 2048
    $region29: #{bert_mask_n_prediction_head.1} parent=1 // pred_fallthru
      _
    // Predicated region
    $region30: #{bert_mask_n_prediction_head.1} parent=1 // pred_check
      _
    $region31: #{bert_mask_n_prediction_head.1} parent=1 // pred_check_branch
      %59 = sbr.rel (0) target = $region33
    $region32: #{bert_mask_n_prediction_head.1} parent=1 // pred_region
      %60 = dma.done [#allocation5], 2048
    $region33: #{bert_mask_n_prediction_head.1} parent=1 // pred_fallthru
      _
    %v61 = vld [vmem:[#allocation2] sm:$0xff]
    %v62 = vld [vmem:[#allocation2 + $0x8] sm:$0xff]
    %v63 = vld [vmem:[#allocation4] sm:$0xff]
    %v64 = vld [vmem:[#allocation4 + $0x8] sm:$0xff]
    %v65 = vld [vmem:[#allocation4 + $0x10] sm:$0xff]
    %v66 = vld [vmem:[#allocation4 + $0x18] sm:$0xff]
    %v67 = vld [vmem:[#allocation4 + $0x20] sm:$0xff]
    %v68 = vld [vmem:[#allocation4 + $0x28] sm:$0xff]
    %v69 = vld [vmem:[#allocation4 + $0x30] sm:$0xff]
    %v70 = vld [vmem:[#allocation4 + $0x38] sm:$0xff]
    %v71 = vld [vmem:[#allocation4 + $0x40] sm:$0xff]
    %v72 = vld [vmem:[#allocation4 + $0x48] sm:$0xff]
    %v73 = vld [vmem:[#allocation4 + $0x50] sm:$0xff]
    %v74 = vld [vmem:[#allocation4 + $0x58] sm:$0xff]
    %v75 = vld [vmem:[#allocation4 + $0x60] sm:$0xff]
    %v76 = vld [vmem:[#allocation4 + $0x68] sm:$0xff]
    %v77 = vld [vmem:[#allocation4 + $0x70] sm:$0xff]
    %v78 = vld [vmem:[#allocation4 + $0x78] sm:$0xff]
    %v79 = vld [vmem:[%s2] sm:$0x1]
    %v81 = vlaneseq
    %v82 = vshrl.u32 %v81, 7
    %v83 = vsub.s32 0, %v82
    %v84 = vrot.slane %v79, %v83
    %86 = vmatprep.subr.mxu0 0.0
    %87 = vmatpush1.msra.mxu0 %v78
    %88 = vmatprep.subr.mxu0 0.0
    %89 = vmatpush1.msra.mxu0 %v77
    %90 = vmatprep.subr.mxu0 0.0
    %91 = vmatpush1.msra.mxu0 %v76
    %92 = vmatprep.subr.mxu0 0.0
    %93 = vmatpush1.msra.mxu0 %v75
    %94 = vmatprep.subr.mxu0 0.0
    %95 = vmatpush1.msra.mxu0 %v74
    %96 = vmatprep.subr.mxu0 0.0
    %97 = vmatpush1.msra.mxu0 %v73
    %98 = vmatprep.subr.mxu0 0.0
    %99 = vmatpush1.msra.mxu0 %v72
    %100 = vmatprep.subr.mxu0 0.0
    %101 = vmatpush1.msra.mxu0 %v71
    %102 = vmatprep.subr.mxu0 0.0
    %103 = vmatpush1.msra.mxu0 %v70
    %104 = vmatprep.subr.mxu0 0.0
    %105 = vmatpush1.msra.mxu0 %v69
    %106 = vmatprep.subr.mxu0 0.0
    %107 = vmatpush1.msra.mxu0 %v68
    %108 = vmatprep.subr.mxu0 0.0
    %109 = vmatpush1.msra.mxu0 %v67
    %110 = vmatprep.subr.mxu0 0.0
    %111 = vmatpush1.msra.mxu0 %v66
    %112 = vmatprep.subr.mxu0 0.0
    %113 = vmatpush1.msra.mxu0 %v65
    %114 = vmatprep.subr.mxu0 0.0
    %115 = vmatpush1.msra.mxu0 %v64
    %116 = vmatprep.subr.mxu0 0.0
    %117 = vmatpush1.msra.mxu0 %v63
    %118 = vmatprep.subr.mxu0 0.0
    %119 = vmatpush2.msra.mxu0 0.0
    %120 = vmatprep.subr.mxu0 0.0
    %121 = vmatpush2.msra.mxu0 0.0
    %122 = vmatprep.subr.mxu0 0.0
    %123 = vmatpush2.msra.mxu0 0.0
    %124 = vmatprep.subr.mxu0 0.0
    %125 = vmatpush2.msra.mxu0 0.0
    %126 = vmatprep.subr.mxu0 0.0
    %127 = vmatpush2.msra.mxu0 0.0
    %128 = vmatprep.subr.mxu0 0.0
    %129 = vmatpush2.msra.mxu0 0.0
    %130 = vmatprep.subr.mxu0 0.0
    %131 = vmatpush2.msra.mxu0 0.0
    %132 = vmatprep.subr.mxu0 0.0
    %133 = vmatpush2.msra.mxu0 0.0
    %134 = vmatprep.subr.mxu0 0.0
    %135 = vmatpush2.msra.mxu0 0.0
    %136 = vmatprep.subr.mxu0 0.0
    %137 = vmatpush2.msra.mxu0 0.0
    %138 = vmatprep.subr.mxu0 0.0
    %139 = vmatpush2.msra.mxu0 0.0
    %140 = vmatprep.subr.mxu0 0.0
    %141 = vmatpush2.msra.mxu0 0.0
    %142 = vmatprep.subr.mxu0 0.0
    %143 = vmatpush2.msra.mxu0 0.0
    %144 = vmatprep.subr.mxu0 0.0
    %145 = vmatpush2.msra.mxu0 0.0
    %146 = vmatprep.subr.mxu0 0.0
    %147 = vmatpush2.msra.mxu0 0.0
    %148 = vmatprep.subr.mxu0 0.0
    %149 = vmatpush2.msra.mxu0 0.0
    %150 = vmatprep.mubr.f32.mxu0 0.0
    %151 = vmatmul.mubr.f32.gmra.mxu0 %v61
    %v152 = vpop.f32.mrf.mxu0
    %v153 = vadd.f32 %v84, %v152
    %v154 = vpop.f32.mrf.mxu0
    %155 = vmatprep.mubr.f32.mxu0 0.0
    %156 = vmatmul.mubr.f32.gmra.mxu0 %v62
    %v157 = vpop.f32.mrf.mxu0
    %v158 = vadd.f32 %v84, %v157
    %v159 = vpop.f32.mrf.mxu0
    %160 = vdwg.mxu0
    %v161 = vmul.f32 %v153, 0.5
    %v162 = vmul.f32 %v158, 0.5
    %v163 = vmul.f32 %v153, 0.70710677
    %v164 = vmul.f32 %v158, 0.70710677
    %v165 = vand.u32 2147483647, %v163
    %v166 = vand.u32 2147483647, %v164
    %v167 = vmul.f32 %v165, 0.3275911
    %v168 = vmul.f32 %v166, 0.3275911
    %v169 = vadd.f32 %v167, 1.0
    %v170 = vadd.f32 %v168, 1.0
    %v171 = vrcp.pop %v169
    %v172 = vmul.f32 1.0, %v171
    %v173 = vrcp.pop %v170
    %v174 = vmul.f32 1.0, %v173
    %v175 = vmul.f32 %v172, 1.0614054
    %v176 = vmul.f32 %v174, 1.0614054
    %v177 = vadd.f32 %v175, -1.4531521
    %v178 = vadd.f32 %v176, -1.4531521
    %v179 = vmul.f32 %v177, %v172
    %v180 = vmul.f32 %v178, %v174
    %v181 = vadd.f32 %v179, 1.4214138
    %v182 = vadd.f32 %v180, 1.4214138
    %v183 = vmul.f32 %v181, %v172
    %v184 = vmul.f32 %v182, %v174
    %v185 = vadd.f32 %v183, -0.28449672
    %v186 = vadd.f32 %v184, -0.28449672
    %v187 = vmul.f32 %v185, %v172
    %v188 = vmul.f32 %v186, %v174
    %v189 = vadd.f32 %v187, 0.2548296
    %v190 = vadd.f32 %v188, 0.2548296
    %v191 = vmul.f32 %v189, %v172
    %v192 = vmul.f32 %v190, %v174
    %v193 = vsub.f32 0.0, %v165
    %v194 = vsub.f32 0.0, %v166
    %v195 = vmul.f32 %v193, %v165
    %v196 = vmul.f32 %v194, %v166
    %v197 = vmul.f32 %v195, 1.442695
    %v198 = vpow.pop %v197
    %v199 = vmul.f32 %v196, 1.442695
    %v200 = vpow.pop %v199
    %v201 = vmul.f32 %v191, %v198
    %v202 = vmul.f32 %v192, %v200
    %v203 = vsub.f32 1.0, %v201
    %v204 = vsub.f32 1.0, %v202
    %vm205 = vcmp.ge.f32.partialorder %v163, 0.0
    %vm206 = vcmp.ge.f32.partialorder %v164, 0.0
    %v207 = vsub.f32 0.0, %v203
    %v208 = vsub.f32 0.0, %v204
    %v209 = vsel %vm205, %v203, %v207
    %v210 = vsel %vm206, %v204, %v208
    %v211 = vadd.f32 %v209, 1.0
    %v212 = vadd.f32 %v210, 1.0
    %v213 = vmul.f32 %v161, %v211
    %v214 = vmul.f32 %v162, %v212
    %v215 = vld [vmem:[#allocation6] sm:$0xff]
    %v216 = vld [vmem:[#allocation6 + $0x8] sm:$0xff]
    %v217 = vld [vmem:[#allocation6 + $0x10] sm:$0xff]
    %v218 = vld [vmem:[#allocation6 + $0x18] sm:$0xff]
    %v219 = vld [vmem:[#allocation6 + $0x20] sm:$0xff]
    %v220 = vld [vmem:[#allocation6 + $0x28] sm:$0xff]
    %v221 = vld [vmem:[#allocation6 + $0x30] sm:$0xff]
    %v222 = vld [vmem:[#allocation6 + $0x38] sm:$0xff]
    %v223 = vld [vmem:[#allocation6 + $0x40] sm:$0xff]
    %v224 = vld [vmem:[#allocation6 + $0x48] sm:$0xff]
    %v225 = vld [vmem:[#allocation6 + $0x50] sm:$0xff]
    %v226 = vld [vmem:[#allocation6 + $0x58] sm:$0xff]
    %v227 = vld [vmem:[#allocation6 + $0x60] sm:$0xff]
    %v228 = vld [vmem:[#allocation6 + $0x68] sm:$0xff]
    %v229 = vld [vmem:[#allocation6 + $0x70] sm:$0xff]
    %v230 = vld [vmem:[#allocation6 + $0x78] sm:$0xff]
    %v231 = vld [vmem:[%s4] sm:$0x1]
    %v233 = vlaneseq
    %v234 = vshrl.u32 %v233, 7
    %v235 = vsub.s32 0, %v234
    %v236 = vrot.slane %v231, %v235
    %238 = vmatprep.subr.mxu0 0.0
    %239 = vmatpush1.msra.mxu0 %v230
    %240 = vmatprep.subr.mxu0 0.0
    %241 = vmatpush1.msra.mxu0 %v229
    %242 = vmatprep.subr.mxu0 0.0
    %243 = vmatpush1.msra.mxu0 %v228
    %244 = vmatprep.subr.mxu0 0.0
    %245 = vmatpush1.msra.mxu0 %v227
    %246 = vmatprep.subr.mxu0 0.0
    %247 = vmatpush1.msra.mxu0 %v226
    %248 = vmatprep.subr.mxu0 0.0
    %249 = vmatpush1.msra.mxu0 %v225
    %250 = vmatprep.subr.mxu0 0.0
    %251 = vmatpush1.msra.mxu0 %v224
    %252 = vmatprep.subr.mxu0 0.0
    %253 = vmatpush1.msra.mxu0 %v223
    %254 = vmatprep.subr.mxu0 0.0
    %255 = vmatpush1.msra.mxu0 %v222
    %256 = vmatprep.subr.mxu0 0.0
    %257 = vmatpush1.msra.mxu0 %v221
    %258 = vmatprep.subr.mxu0 0.0
    %259 = vmatpush1.msra.mxu0 %v220
    %260 = vmatprep.subr.mxu0 0.0
    %261 = vmatpush1.msra.mxu0 %v219
    %262 = vmatprep.subr.mxu0 0.0
    %263 = vmatpush1.msra.mxu0 %v218
    %264 = vmatprep.subr.mxu0 0.0
    %265 = vmatpush1.msra.mxu0 %v217
    %266 = vmatprep.subr.mxu0 0.0
    %267 = vmatpush1.msra.mxu0 %v216
    %268 = vmatprep.subr.mxu0 0.0
    %269 = vmatpush1.msra.mxu0 %v215
    %270 = vmatprep.subr.mxu0 0.0
    %271 = vmatpush2.msra.mxu0 0.0
    %272 = vmatprep.subr.mxu0 0.0
    %273 = vmatpush2.msra.mxu0 0.0
    %274 = vmatprep.subr.mxu0 0.0
    %275 = vmatpush2.msra.mxu0 0.0
    %276 = vmatprep.subr.mxu0 0.0
    %277 = vmatpush2.msra.mxu0 0.0
    %278 = vmatprep.subr.mxu0 0.0
    %279 = vmatpush2.msra.mxu0 0.0
    %280 = vmatprep.subr.mxu0 0.0
    %281 = vmatpush2.msra.mxu0 0.0
    %282 = vmatprep.subr.mxu0 0.0
    %283 = vmatpush2.msra.mxu0 0.0
    %284 = vmatprep.subr.mxu0 0.0
    %285 = vmatpush2.msra.mxu0 0.0
    %286 = vmatprep.subr.mxu0 0.0
    %287 = vmatpush2.msra.mxu0 0.0
    %288 = vmatprep.subr.mxu0 0.0
    %289 = vmatpush2.msra.mxu0 0.0
    %290 = vmatprep.subr.mxu0 0.0
    %291 = vmatpush2.msra.mxu0 0.0
    %292 = vmatprep.subr.mxu0 0.0
    %293 = vmatpush2.msra.mxu0 0.0
    %294 = vmatprep.subr.mxu0 0.0
    %295 = vmatpush2.msra.mxu0 0.0
    %296 = vmatprep.subr.mxu0 0.0
    %297 = vmatpush2.msra.mxu0 0.0
    %298 = vmatprep.subr.mxu0 0.0
    %299 = vmatpush2.msra.mxu0 0.0
    %300 = vmatprep.subr.mxu0 0.0
    %301 = vmatpush2.msra.mxu0 0.0
    %302 = vmatprep.mubr.f32.mxu0 0.0
    %303 = vmatmul.mubr.f32.gmra.mxu0 %v213
    %v304 = vpop.f32.mrf.mxu0
    %v305 = vadd.f32 %v236, %v304
    %v306 = vpop.f32.mrf.mxu0
    %307 = vmatprep.mubr.f32.mxu0 0.0
    %308 = vmatmul.mubr.f32.gmra.mxu0 %v214
    %v309 = vpop.f32.mrf.mxu0
    %v310 = vadd.f32 %v236, %v309
    %v311 = vpop.f32.mrf.mxu0
    %312 = vdwg.mxu0
    %313 = vst [vmem:[%s5] sm:$0xff] %v305
    %314 = vst [vmem:[%s5 + $0x8] sm:$0xff] %v310
    // Predicated region
    $region34: #{bert_mask_n_prediction_head.1} parent=1 // pred_check
      _
    $region35: #{bert_mask_n_prediction_head.1} parent=1 // pred_check_branch
      %316 = sbr.rel (0) target = $region37
    $region36: #{bert_mask_n_prediction_head.1} parent=1 // pred_region
      _
    $region37: #{bert_mask_n_prediction_head.1} parent=1 // pred_fallthru
      _
    // Predicated region
    $region38: #{bert_mask_n_prediction_head.1} parent=1 // pred_check
      _
    $region39: #{bert_mask_n_prediction_head.1} parent=1 // pred_check_branch
      %318 = sbr.rel (0) target = $region41
    $region40: #{bert_mask_n_prediction_head.1} parent=1 // pred_region
      _
    $region41: #{bert_mask_n_prediction_head.1} parent=1 // pred_fallthru
      _
    %319 = vsyncpa [#allocation3], 1
    %320 = vsyncpa [#allocation5], 1

</llo_original>
